<compile_context>
chip_gen: v6e
topology: v6e:2x2x1
jax: 0.10.0
libtpu: 0.0.40
codegen_flags: <defaults>
</compile_context>

<pallas_src>
import functools

import jax
import jax.numpy as jnp
from jax import lax
from jax.experimental import pallas as pl
from jax.experimental.pallas import tpu as pltpu

EPS = 1e-5          # nn.BatchNorm2d default eps
N_TAPS = 4          # the four 2x2 max-pool taps, fused into the conv matmul
KKP = 128           # contraction dim (KH*KW*CI = 75) zero-padded to a full lane group


def _round_up(x, m):
    return ((x + m - 1) // m) * m


def _conv_bn_relu_pool_kernel(p_ref, w_ref, gb_ref, out_ref, sum_sc, ssq_sc, *, n_valid):
    """Two-pass fused Conv+BN+ReLU+Pool body.

    grid = (2, nM): axis 0 is the pass (0 = stats, 1 = apply), axis 1 tiles M.
      p_ref : (N_TAPS, KKP, TM)  im2col patches for this M tile (pooled positions lane-dense)
      w_ref : (CO, KKP)          conv weights, contraction dim zero-padded
      gb_ref: (CO, 2)            column 0 = gamma, column 1 = beta
      out   : (CO, TM)
      sum_sc/ssq_sc : (CO, 1)    persistent per-channel accumulators (VMEM scratch)
    """
    p = pl.program_id(0)
    i = pl.program_id(1)
    w = w_ref[...]

    @pl.when((p == 0) & (i == 0))
    def _():
        sum_sc[...] = jnp.zeros_like(sum_sc)
        ssq_sc[...] = jnp.zeros_like(ssq_sc)

    @pl.when(p == 0)
    def _():
        # Stats pass: per-channel sum / sum-of-squares over all conv positions.
        # Zero-padded patch columns produce y == 0 (no bias), so they drop out.
        s = jnp.zeros((w.shape[0], 1), jnp.float32)
        q = jnp.zeros((w.shape[0], 1), jnp.float32)
        for t in range(N_TAPS):
            y = jnp.dot(w, p_ref[t], preferred_element_type=jnp.float32)
            s = s + jnp.sum(y, axis=1, keepdims=True)
            q = q + jnp.sum(y * y, axis=1, keepdims=True)
        sum_sc[...] += s
        ssq_sc[...] += q
        # out_ref is intentionally not written in this pass; the stale tile it
        # writes back is fully overwritten by pass 1 before the call returns.

    @pl.when(p == 1)
    def _():
        inv_n = 1.0 / n_valid
        mean = sum_sc[...] * inv_n
        var = jnp.maximum(ssq_sc[...] * inv_n - mean * mean, 0.0)
        inv = lax.rsqrt(var + EPS)
        scale = gb_ref[:, 0:1] * inv                 # gamma / sqrt(var + eps)
        shift = gb_ref[:, 1:2] - mean * scale        # beta - mean * scale
        acc = None
        for t in range(N_TAPS):                      # one tap at a time: low vreg pressure
            y = jnp.dot(w, p_ref[t], preferred_element_type=jnp.float32)
            z = jnp.maximum(y * scale + shift, 0.0)  # BN affine + ReLU
            acc = z if acc is None else jnp.maximum(acc, z)   # 2x2 max-pool
        out_ref[...] = acc


def basic_ext_forward(x_nchw, conv_w, conv_b, gamma, beta, *,
                      compute_dtype=jnp.float32, tile_m=512):
    """BasicExt forward (training-mode BatchNorm).

    compute_dtype: staging dtype for patches/weights (bf16 halves the dominant DMA
        traffic; accumulation and BN statistics stay f32).
    tile_m: target pooled positions per grid step (rounded to a multiple of 128).
    """
    del conv_b  # cancels exactly under training-mode BatchNorm (mean subtraction)
    N, CI, H, W = x_nchw.shape
    CO, _, KH, KW = conv_w.shape
    assert H % 2 == 0 and W % 2 == 0
    Ho, Wo = H // 2, W // 2
    KK = KH * KW * CI
    assert KK <= KKP
    M = N * Ho * Wo                                   # pooled positions (lane axis)

    # Pad M to a lane multiple, then to a whole number of tiles.
    m128 = _round_up(M, 128)
    tm = min(_round_up(tile_m, 128), m128)
    m_pad = _round_up(m128, tm)
    n_tiles = m_pad // tm

    # ---- host staging ----------------------------------------------------------
    # Channel-first padded input (input-sized, cheap); all slices read this tensor.
    xcf = jnp.transpose(x_nchw, (1, 0, 2, 3))                 # (CI, N, H, W)
    xp = jnp.pad(xcf, ((0, 0), (0, 0), (2, 2), (2, 2)))       # conv padding = 2

    # Patches built directly in (tap, KK, M) orientation -> no full-size transpose.
    # Row order (kh, kw, ci) matches the flattened conv weight below.
    taps = []
    for di in (0, 1):
        for dj in (0, 1):
            rows = [
                xp[:, :, kh + di:kh + di + 2 * Ho:2,
                         kw + dj:kw + dj + 2 * Wo:2].reshape(CI, M)
                for kh in range(KH) for kw in range(KW)
            ]
            taps.append(jnp.concatenate(rows, axis=0))        # (KK, M)
    p_all = jnp.stack(taps, axis=0)                           # (N_TAPS, KK, M)
    p_all = jnp.pad(p_all, ((0, 0), (0, KKP - KK), (0, m_pad - M)))
    p_all = p_all.astype(compute_dtype)

    # PyTorch conv weight (CO, CI, KH, KW) -> (CO, KK) in (kh, kw, ci) order.
    w2d = jnp.transpose(conv_w, (0, 2, 3, 1)).reshape(CO, KK)
    w2d = jnp.pad(w2d, ((0, 0), (0, KKP - KK))).astype(compute_dtype)
    gb = jnp.stack([gamma, beta], axis=1).astype(jnp.float32)  # (CO, 2)

    n_valid = float(N * H * W)   # BN population: all N*H*W conv positions (= 4*M taps)
    kernel = functools.partial(_conv_bn_relu_pool_kernel, n_valid=n_valid)

    itemsize = jnp.dtype(compute_dtype).itemsize
    cost = pl.CostEstimate(
        flops=2 * 2 * N_TAPS * CO * KKP * m_pad,               # matmuls, both passes
        transcendentals=CO * n_tiles,                          # rsqrt in pass 1
        bytes_accessed=(2 * N_TAPS * KKP * m_pad * itemsize    # patches read twice
                        + 2 * n_tiles * CO * KKP * itemsize    # weights per grid step
                        + 2 * CO * m_pad * 4))                 # output writebacks

    out = pl.pallas_call(
        kernel,
        out_shape=jax.ShapeDtypeStruct((CO, m_pad), jnp.float32),
        grid=(2, n_tiles),
        in_specs=[
            pl.BlockSpec((N_TAPS, KKP, tm), lambda p, i: (0, 0, i)),
            pl.BlockSpec((CO, KKP), lambda p, i: (0, 0)),
            pl.BlockSpec((CO, 2), lambda p, i: (0, 0)),
        ],
        out_specs=pl.BlockSpec((CO, tm), lambda p, i: (0, i)),
        scratch_shapes=[pltpu.VMEM((CO, 1), jnp.float32),
                        pltpu.VMEM((CO, 1), jnp.float32)],
        compiler_params=pltpu.CompilerParams(
            # Both axes sequential: pass 1 depends on pass 0's scratch, and the stats
            # pass reduces across M tiles into shared scratch.
            dimension_semantics=("arbitrary", "arbitrary"),
            # Per-step working set (2 bufs x (4,128,tm) patches + output tile) is
            # ~2 MiB at tm=512/f32 -> safely inside v7x's 64 MiB VMEM.
            vmem_limit_bytes=32 * 1024 * 1024,
        ),
        cost_estimate=cost,
    )(p_all, w2d, gb)

    out = out[:, :M]                                   # drop lane padding
    return jnp.transpose(out.reshape(CO, N, Ho, Wo), (1, 0, 2, 3))


def reference(x, conv_w, conv_b, gamma, beta):
    """Pure-JAX reference matching PyTorch training-mode forward (bias included)."""
    y = lax.conv_general_dilated(x, conv_w, window_strides=(1, 1),
                                 padding=((2, 2), (2, 2)),
                                 dimension_numbers=('NCHW', 'OIHW', 'NCHW'))
    y = y + conv_b.reshape(1, -1, 1, 1)
    mean = jnp.mean(y, axis=(0, 2, 3), keepdims=True)
    var = jnp.mean((y - mean) ** 2, axis=(0, 2, 3), keepdims=True)  # biased var
    y = (y - mean) * lax.rsqrt(var + EPS) * gamma.reshape(1, -1, 1, 1) + beta.reshape(1, -1, 1, 1)
    y = jnp.maximum(y, 0.0)
    N, C, H, W = y.shape
    return y.reshape(N, C, H // 2, 2, W // 2, 2).max(axis=(3, 5))


if __name__ == "__main__":
    key = jax.random.PRNGKey(0)
    k1, k2, k3, k4, k5 = jax.random.split(key, 5)

    x = jax.random.normal(k1, (2, 3, 16, 16), dtype=jnp.float32)

    # Shapes from nn.Conv2d(3, 16, 5, padding=2), nn.BatchNorm2d(16).
    fan_in = 3 * 5 * 5
    bound = 1.0 / (fan_in ** 0.5)
    conv_w = jax.random.uniform(k2, (16, 3, 5, 5), jnp.float32, -bound, bound)
    conv_b = jax.random.uniform(k3, (16,), jnp.float32, -bound, bound)
    gamma = jax.random.uniform(k4, (16,), jnp.float32, 0.5, 1.5)
    beta = jax.random.uniform(k5, (16,), jnp.float32, -0.5, 0.5)

    ref = reference(x, conv_w, conv_b, gamma, beta)

    # Exact-semantics path: f32 staging, tight tolerance.
    fwd_f32 = jax.jit(basic_ext_forward)
    out = jax.block_until_ready(fwd_f32(x, conv_w, conv_b, gamma, beta))
    assert out.shape == (2, 16, 8, 8), out.shape
    assert jnp.allclose(out, ref, rtol=1e-4, atol=1e-4), float(jnp.max(jnp.abs(out - ref)))

    # Fast path per perf review: bf16-staged patches/weights (f32 accumulation & BN
    # stats); tolerance loosened to cover bf16 input quantization.
    fwd_bf16 = jax.jit(functools.partial(basic_ext_forward, compute_dtype=jnp.bfloat16))
    out_bf16 = jax.block_until_ready(fwd_bf16(x, conv_w, conv_b, gamma, beta))
    assert jnp.allclose(out_bf16, ref, rtol=5e-2, atol=5e-2), \
        float(jnp.max(jnp.abs(out_bf16 - ref)))

    print("KERNEL_OK")
</pallas_src>

<mosaic_0001>
module attributes {stable_mosaic.version = 11 : i64} {
  func.func @_conv_bn_relu_pool_kernel(%arg0: i32, %arg1: i32, %arg2: memref<4x128x128xf32, #tpu.memory_space<vmem>>, %arg3: memref<16x128xf32, #tpu.memory_space<vmem>>, %arg4: memref<16x2xf32, #tpu.memory_space<vmem>>, %arg5: memref<16x128xf32, #tpu.memory_space<vmem>>, %arg6: memref<16x1xf32, #tpu.memory_space<vmem>>, %arg7: memref<16x1xf32, #tpu.memory_space<vmem>>) attributes {dimension_semantics = [#tpu.dimension_semantics<arbitrary>, #tpu.dimension_semantics<arbitrary>], iteration_bounds = array<i64: 2, 1>, scalar_prefetch = 0 : i64, scratch_operands = 2 : i64, tpu.core_type = #tpu.core_type<tc>, window_params = [{transform_indices = @transform_0, window_bounds = array<i64: 4, 128, 128>}, {pipeline_mode = #tpu.pipeline_mode<synchronous>, transform_indices = @transform_1, window_bounds = array<i64: 16, 128>}, {pipeline_mode = #tpu.pipeline_mode<synchronous>, transform_indices = @transform_2, window_bounds = array<i64: 16, 2>}, {transform_indices = @transform_3, window_bounds = array<i64: 16, 128>}]} {
    %c0 = arith.constant 0 : index
    %c0_0 = arith.constant 0 : index
    %0 = vector.load %arg3[%c0, %c0_0] : memref<16x128xf32, #tpu.memory_space<vmem>>, vector<16x128xf32>
    %c0_i32 = arith.constant 0 : i32
    %1 = arith.cmpi eq, %arg0, %c0_i32 : i32
    %c0_i32_1 = arith.constant 0 : i32
    %2 = arith.cmpi eq, %arg1, %c0_i32_1 : i32
    %3 = arith.andi %1, %2 : i1
    %4 = arith.extui %3 : i1 to i32
    %c0_i32_2 = arith.constant 0 : i32
    %5 = arith.cmpi ne, %4, %c0_i32_2 : i32
    scf.if %5 {
      %cst = arith.constant 0.000000e+00 : f32
      %12 = vector.broadcast %cst : f32 to vector<16x1xf32>
      %c0_6 = arith.constant 0 : index
      %c0_7 = arith.constant 0 : index
      %13 = vector.load %arg6[%c0_6, %c0_7] : memref<16x1xf32, #tpu.memory_space<vmem>>, vector<16x1xf32>
      tpu.vector_store %arg6[%c0_6, %c0_7], %12 {strides = array<i32>} : memref<16x1xf32, #tpu.memory_space<vmem>>, vector<16x1xf32>,
      %cst_8 = arith.constant 0.000000e+00 : f32
      %14 = vector.broadcast %cst_8 : f32 to vector<16x1xf32>
      %c0_9 = arith.constant 0 : index
      %c0_10 = arith.constant 0 : index
      %15 = vector.load %arg7[%c0_9, %c0_10] : memref<16x1xf32, #tpu.memory_space<vmem>>, vector<16x1xf32>
      tpu.vector_store %arg7[%c0_9, %c0_10], %14 {strides = array<i32>} : memref<16x1xf32, #tpu.memory_space<vmem>>, vector<16x1xf32>,
    } else {
    }
    %c0_i32_3 = arith.constant 0 : i32
    %6 = arith.cmpi eq, %arg0, %c0_i32_3 : i32
    %7 = arith.extui %6 : i1 to i32
    %c0_i32_4 = arith.constant 0 : i32
    %8 = arith.cmpi ne, %7, %c0_i32_4 : i32
    scf.if %8 {
      %cst = arith.constant 0.000000e+00 : f32
      %12 = vector.broadcast %cst : f32 to vector<16x1xf32>
      %cst_6 = arith.constant 0.000000e+00 : f32
      %13 = vector.broadcast %cst_6 : f32 to vector<16x1xf32>
      %c0_7 = arith.constant 0 : index
      %c0_8 = arith.constant 0 : index
      %c0_9 = arith.constant 0 : index
      %14 = vector.load %arg2[%c0_7, %c0_8, %c0_9] : memref<4x128x128xf32, #tpu.memory_space<vmem>>, vector<1x128x128xf32>
      %15 = vector.shape_cast %14 : vector<1x128x128xf32> to vector<128x128xf32>
      %cst_10 = arith.constant dense<0.000000e+00> : vector<16x128xf32>
      %16 = tpu.matmul %0, %15, %cst_10 {dimension_numbers = #tpu.dot_dimension_numbers<[1], [0], [0], [1], [0, 0, 1, 1], [], []>} : vector<16x128xf32>, vector<128x128xf32>, vector<16x128xf32> -> vector<16x128xf32>
      %cst_11 = arith.constant dense<0.000000e+00> : vector<16xf32>
      %17 = vector.multi_reduction <add>, %16, %cst_11 [1] : vector<16x128xf32> to vector<16xf32>
      %18 = vector.shape_cast %17 : vector<16xf32> to vector<16x1xf32>
      %19 = arith.addf %12, %18 : vector<16x1xf32>
      %20 = arith.mulf %16, %16 : vector<16x128xf32>
      %cst_12 = arith.constant dense<0.000000e+00> : vector<16xf32>
      %21 = vector.multi_reduction <add>, %20, %cst_12 [1] : vector<16x128xf32> to vector<16xf32>
      %22 = vector.shape_cast %21 : vector<16xf32> to vector<16x1xf32>
      %23 = arith.addf %13, %22 : vector<16x1xf32>
      %c1 = arith.constant 1 : index
      %c0_13 = arith.constant 0 : index
      %c0_14 = arith.constant 0 : index
      %24 = vector.load %arg2[%c1, %c0_13, %c0_14] : memref<4x128x128xf32, #tpu.memory_space<vmem>>, vector<1x128x128xf32>
      %25 = vector.shape_cast %24 : vector<1x128x128xf32> to vector<128x128xf32>
      %cst_15 = arith.constant dense<0.000000e+00> : vector<16x128xf32>
      %26 = tpu.matmul %0, %25, %cst_15 {dimension_numbers = #tpu.dot_dimension_numbers<[1], [0], [0], [1], [0, 0, 1, 1], [], []>} : vector<16x128xf32>, vector<128x128xf32>, vector<16x128xf32> -> vector<16x128xf32>
      %cst_16 = arith.constant dense<0.000000e+00> : vector<16xf32>
      %27 = vector.multi_reduction <add>, %26, %cst_16 [1] : vector<16x128xf32> to vector<16xf32>
      %28 = vector.shape_cast %27 : vector<16xf32> to vector<16x1xf32>
      %29 = arith.addf %19, %28 : vector<16x1xf32>
      %30 = arith.mulf %26, %26 : vector<16x128xf32>
      %cst_17 = arith.constant dense<0.000000e+00> : vector<16xf32>
      %31 = vector.multi_reduction <add>, %30, %cst_17 [1] : vector<16x128xf32> to vector<16xf32>
      %32 = vector.shape_cast %31 : vector<16xf32> to vector<16x1xf32>
      %33 = arith.addf %23, %32 : vector<16x1xf32>
      %c2 = arith.constant 2 : index
      %c0_18 = arith.constant 0 : index
      %c0_19 = arith.constant 0 : index
      %34 = vector.load %arg2[%c2, %c0_18, %c0_19] : memref<4x128x128xf32, #tpu.memory_space<vmem>>, vector<1x128x128xf32>
      %35 = vector.shape_cast %34 : vector<1x128x128xf32> to vector<128x128xf32>
      %cst_20 = arith.constant dense<0.000000e+00> : vector<16x128xf32>
      %36 = tpu.matmul %0, %35, %cst_20 {dimension_numbers = #tpu.dot_dimension_numbers<[1], [0], [0], [1], [0, 0, 1, 1], [], []>} : vector<16x128xf32>, vector<128x128xf32>, vector<16x128xf32> -> vector<16x128xf32>
      %cst_21 = arith.constant dense<0.000000e+00> : vector<16xf32>
      %37 = vector.multi_reduction <add>, %36, %cst_21 [1] : vector<16x128xf32> to vector<16xf32>
      %38 = vector.shape_cast %37 : vector<16xf32> to vector<16x1xf32>
      %39 = arith.addf %29, %38 : vector<16x1xf32>
      %40 = arith.mulf %36, %36 : vector<16x128xf32>
      %cst_22 = arith.constant dense<0.000000e+00> : vector<16xf32>
      %41 = vector.multi_reduction <add>, %40, %cst_22 [1] : vector<16x128xf32> to vector<16xf32>
      %42 = vector.shape_cast %41 : vector<16xf32> to vector<16x1xf32>
      %43 = arith.addf %33, %42 : vector<16x1xf32>
      %c3 = arith.constant 3 : index
      %c0_23 = arith.constant 0 : index
      %c0_24 = arith.constant 0 : index
      %44 = vector.load %arg2[%c3, %c0_23, %c0_24] : memref<4x128x128xf32, #tpu.memory_space<vmem>>, vector<1x128x128xf32>
      %45 = vector.shape_cast %44 : vector<1x128x128xf32> to vector<128x128xf32>
      %cst_25 = arith.constant dense<0.000000e+00> : vector<16x128xf32>
      %46 = tpu.matmul %0, %45, %cst_25 {dimension_numbers = #tpu.dot_dimension_numbers<[1], [0], [0], [1], [0, 0, 1, 1], [], []>} : vector<16x128xf32>, vector<128x128xf32>, vector<16x128xf32> -> vector<16x128xf32>
      %cst_26 = arith.constant dense<0.000000e+00> : vector<16xf32>
      %47 = vector.multi_reduction <add>, %46, %cst_26 [1] : vector<16x128xf32> to vector<16xf32>
      %48 = vector.shape_cast %47 : vector<16xf32> to vector<16x1xf32>
      %49 = arith.addf %39, %48 : vector<16x1xf32>
      %50 = arith.mulf %46, %46 : vector<16x128xf32>
      %cst_27 = arith.constant dense<0.000000e+00> : vector<16xf32>
      %51 = vector.multi_reduction <add>, %50, %cst_27 [1] : vector<16x128xf32> to vector<16xf32>
      %52 = vector.shape_cast %51 : vector<16xf32> to vector<16x1xf32>
      %53 = arith.addf %43, %52 : vector<16x1xf32>
      %c0_28 = arith.constant 0 : index
      %c0_29 = arith.constant 0 : index
      %54 = vector.load %arg6[%c0_28, %c0_29] : memref<16x1xf32, #tpu.memory_space<vmem>>, vector<16x1xf32>
      %55 = arith.addf %54, %49 : vector<16x1xf32>
      %c0_30 = arith.constant 0 : index
      %c0_31 = arith.constant 0 : index
      %56 = vector.load %arg6[%c0_30, %c0_31] : memref<16x1xf32, #tpu.memory_space<vmem>>, vector<16x1xf32>
      tpu.vector_store %arg6[%c0_30, %c0_31], %55 {strides = array<i32>} : memref<16x1xf32, #tpu.memory_space<vmem>>, vector<16x1xf32>,
      %c0_32 = arith.constant 0 : index
      %c0_33 = arith.constant 0 : index
      %57 = vector.load %arg7[%c0_32, %c0_33] : memref<16x1xf32, #tpu.memory_space<vmem>>, vector<16x1xf32>
      %58 = arith.addf %57, %53 : vector<16x1xf32>
      %c0_34 = arith.constant 0 : index
      %c0_35 = arith.constant 0 : index
      %59 = vector.load %arg7[%c0_34, %c0_35] : memref<16x1xf32, #tpu.memory_space<vmem>>, vector<16x1xf32>
      tpu.vector_store %arg7[%c0_34, %c0_35], %58 {strides = array<i32>} : memref<16x1xf32, #tpu.memory_space<vmem>>, vector<16x1xf32>,
    } else {
    }
    %c1_i32 = arith.constant 1 : i32
    %9 = arith.cmpi eq, %arg0, %c1_i32 : i32
    %10 = arith.extui %9 : i1 to i32
    %c0_i32_5 = arith.constant 0 : i32
    %11 = arith.cmpi ne, %10, %c0_i32_5 : i32
    scf.if %11 {
      %c0_6 = arith.constant 0 : index
      %c0_7 = arith.constant 0 : index
      %12 = vector.load %arg6[%c0_6, %c0_7] : memref<16x1xf32, #tpu.memory_space<vmem>>, vector<16x1xf32>
      %cst = arith.constant 0.001953125 : f32
      %13 = vector.broadcast %cst : f32 to vector<16x1xf32>
      %14 = arith.mulf %12, %13 : vector<16x1xf32>
      %c0_8 = arith.constant 0 : index
      %c0_9 = arith.constant 0 : index
      %15 = vector.load %arg7[%c0_8, %c0_9] : memref<16x1xf32, #tpu.memory_space<vmem>>, vector<16x1xf32>
      %cst_10 = arith.constant 0.001953125 : f32
      %16 = vector.broadcast %cst_10 : f32 to vector<16x1xf32>
      %17 = arith.mulf %15, %16 : vector<16x1xf32>
      %18 = arith.mulf %14, %14 : vector<16x1xf32>
      %19 = arith.subf %17, %18 : vector<16x1xf32>
      %cst_11 = arith.constant 0.000000e+00 : f32
      %20 = vector.broadcast %cst_11 : f32 to vector<16x1xf32>
      %21 = arith.maximumf %19, %20 : vector<16x1xf32>
      %cst_12 = arith.constant 9.99999974E-6 : f32
      %22 = vector.broadcast %cst_12 : f32 to vector<16x1xf32>
      %23 = arith.addf %21, %22 : vector<16x1xf32>
      %24 = math.rsqrt %23 : vector<16x1xf32>
      %c0_13 = arith.constant 0 : index
      %c0_14 = arith.constant 0 : index
      %25 = vector.load %arg4[%c0_13, %c0_14] : memref<16x2xf32, #tpu.memory_space<vmem>>, vector<16x1xf32>
      %26 = arith.mulf %25, %24 : vector<16x1xf32>
      %c0_15 = arith.constant 0 : index
      %c1 = arith.constant 1 : index
      %27 = vector.load %arg4[%c0_15, %c1] : memref<16x2xf32, #tpu.memory_space<vmem>>, vector<16x1xf32>
      %28 = arith.mulf %14, %26 : vector<16x1xf32>
      %29 = arith.subf %27, %28 : vector<16x1xf32>
      %c0_16 = arith.constant 0 : index
      %c0_17 = arith.constant 0 : index
      %c0_18 = arith.constant 0 : index
      %30 = vector.load %arg2[%c0_16, %c0_17, %c0_18] : memref<4x128x128xf32, #tpu.memory_space<vmem>>, vector<1x128x128xf32>
      %31 = vector.shape_cast %30 : vector<1x128x128xf32> to vector<128x128xf32>
      %cst_19 = arith.constant dense<0.000000e+00> : vector<16x128xf32>
      %32 = tpu.matmul %0, %31, %cst_19 {dimension_numbers = #tpu.dot_dimension_numbers<[1], [0], [0], [1], [0, 0, 1, 1], [], []>} : vector<16x128xf32>, vector<128x128xf32>, vector<16x128xf32> -> vector<16x128xf32>
      %33 = vector.broadcast %26 : vector<16x1xf32> to vector<16x128xf32>
      %34 = arith.mulf %32, %33 : vector<16x128xf32>
      %35 = vector.broadcast %29 : vector<16x1xf32> to vector<16x128xf32>
      %36 = arith.addf %34, %35 : vector<16x128xf32>
      %cst_20 = arith.constant 0.000000e+00 : f32
      %37 = vector.broadcast %cst_20 : f32 to vector<16x128xf32>
      %38 = arith.maximumf %36, %37 : vector<16x128xf32>
      %c1_21 = arith.constant 1 : index
      %c0_22 = arith.constant 0 : index
      %c0_23 = arith.constant 0 : index
      %39 = vector.load %arg2[%c1_21, %c0_22, %c0_23] : memref<4x128x128xf32, #tpu.memory_space<vmem>>, vector<1x128x128xf32>
      %40 = vector.shape_cast %39 : vector<1x128x128xf32> to vector<128x128xf32>
      %cst_24 = arith.constant dense<0.000000e+00> : vector<16x128xf32>
      %41 = tpu.matmul %0, %40, %cst_24 {dimension_numbers = #tpu.dot_dimension_numbers<[1], [0], [0], [1], [0, 0, 1, 1], [], []>} : vector<16x128xf32>, vector<128x128xf32>, vector<16x128xf32> -> vector<16x128xf32>
      %42 = vector.broadcast %26 : vector<16x1xf32> to vector<16x128xf32>
      %43 = arith.mulf %41, %42 : vector<16x128xf32>
      %44 = vector.broadcast %29 : vector<16x1xf32> to vector<16x128xf32>
      %45 = arith.addf %43, %44 : vector<16x128xf32>
      %cst_25 = arith.constant 0.000000e+00 : f32
      %46 = vector.broadcast %cst_25 : f32 to vector<16x128xf32>
      %47 = arith.maximumf %45, %46 : vector<16x128xf32>
      %48 = arith.maximumf %38, %47 : vector<16x128xf32>
      %c2 = arith.constant 2 : index
      %c0_26 = arith.constant 0 : index
      %c0_27 = arith.constant 0 : index
      %49 = vector.load %arg2[%c2, %c0_26, %c0_27] : memref<4x128x128xf32, #tpu.memory_space<vmem>>, vector<1x128x128xf32>
      %50 = vector.shape_cast %49 : vector<1x128x128xf32> to vector<128x128xf32>
      %cst_28 = arith.constant dense<0.000000e+00> : vector<16x128xf32>
      %51 = tpu.matmul %0, %50, %cst_28 {dimension_numbers = #tpu.dot_dimension_numbers<[1], [0], [0], [1], [0, 0, 1, 1], [], []>} : vector<16x128xf32>, vector<128x128xf32>, vector<16x128xf32> -> vector<16x128xf32>
      %52 = vector.broadcast %26 : vector<16x1xf32> to vector<16x128xf32>
      %53 = arith.mulf %51, %52 : vector<16x128xf32>
      %54 = vector.broadcast %29 : vector<16x1xf32> to vector<16x128xf32>
      %55 = arith.addf %53, %54 : vector<16x128xf32>
      %cst_29 = arith.constant 0.000000e+00 : f32
      %56 = vector.broadcast %cst_29 : f32 to vector<16x128xf32>
      %57 = arith.maximumf %55, %56 : vector<16x128xf32>
      %58 = arith.maximumf %48, %57 : vector<16x128xf32>
      %c3 = arith.constant 3 : index
      %c0_30 = arith.constant 0 : index
      %c0_31 = arith.constant 0 : index
      %59 = vector.load %arg2[%c3, %c0_30, %c0_31] : memref<4x128x128xf32, #tpu.memory_space<vmem>>, vector<1x128x128xf32>
      %60 = vector.shape_cast %59 : vector<1x128x128xf32> to vector<128x128xf32>
      %cst_32 = arith.constant dense<0.000000e+00> : vector<16x128xf32>
      %61 = tpu.matmul %0, %60, %cst_32 {dimension_numbers = #tpu.dot_dimension_numbers<[1], [0], [0], [1], [0, 0, 1, 1], [], []>} : vector<16x128xf32>, vector<128x128xf32>, vector<16x128xf32> -> vector<16x128xf32>
      %62 = vector.broadcast %26 : vector<16x1xf32> to vector<16x128xf32>
      %63 = arith.mulf %61, %62 : vector<16x128xf32>
      %64 = vector.broadcast %29 : vector<16x1xf32> to vector<16x128xf32>
      %65 = arith.addf %63, %64 : vector<16x128xf32>
      %cst_33 = arith.constant 0.000000e+00 : f32
      %66 = vector.broadcast %cst_33 : f32 to vector<16x128xf32>
      %67 = arith.maximumf %65, %66 : vector<16x128xf32>
      %68 = arith.maximumf %58, %67 : vector<16x128xf32>
      %c0_34 = arith.constant 0 : index
      %c0_35 = arith.constant 0 : index
      %69 = vector.load %arg5[%c0_34, %c0_35] : memref<16x128xf32, #tpu.memory_space<vmem>>, vector<16x128xf32>
      tpu.vector_store %arg5[%c0_34, %c0_35], %68 {strides = array<i32>} : memref<16x128xf32, #tpu.memory_space<vmem>>, vector<16x128xf32>,
    } else {
    }
    return
  }
  func.func @transform_0(%arg0: i32, %arg1: i32) -> (i32, i32, i32) {
    %c0_i32 = arith.constant 0 : i32
    %c0_i32_0 = arith.constant 0 : i32
    %c0_i32_1 = arith.constant 0 : i32
    return %c0_i32, %c0_i32_0, %arg1 : i32, i32, i32
  }
  func.func @transform_1(%arg0: i32, %arg1: i32) -> (i32, i32) {
    %c0_i32 = arith.constant 0 : i32
    %c0_i32_0 = arith.constant 0 : i32
    %c0_i32_1 = arith.constant 0 : i32
    return %c0_i32, %c0_i32_0 : i32, i32
  }
  func.func @transform_2(%arg0: i32, %arg1: i32) -> (i32, i32) {
    %c0_i32 = arith.constant 0 : i32
    %c0_i32_0 = arith.constant 0 : i32
    %c0_i32_1 = arith.constant 0 : i32
    return %c0_i32, %c0_i32_0 : i32, i32
  }
  func.func @transform_3(%arg0: i32, %arg1: i32) -> (i32, i32) {
    %c0_i32 = arith.constant 0 : i32
    %c0_i32_0 = arith.constant 0 : i32
    return %c0_i32, %arg1 : i32, i32
  }
}

</mosaic_0001>

<llo_original>
// kernel: basic_ext_forward.1
$region0: #{basic_ext_forward.1}
  #allocation0 [shape = 'u32[]', space=smem, size = 0x4, offset = 0x4, fixed_abs, tag = 'smem constant byte address 0x4 - core index']
  #allocation1 [shape = 'u32[144,128]{1,0:T(1,128)}', space=vmem, size = 0x12000, scoped, tag = 'internal scratch']
  #allocation2 [shape = 'f32[16,1]{1,0:T(8,128)}', space=vmem, size = 0x2000, scoped, tag = 'scratch operand']
  #allocation3 [shape = 'f32[16,1]{1,0:T(8,128)}', space=vmem, size = 0x2000, scoped, tag = 'scratch operand']
  %s0 = inlined_call_operand.vmem [shape: f32[4,128,128], index: 0, kind: input, shape index: {}]
  %s1 = inlined_call_operand.vmem [shape: f32[16,128], index: 1, kind: input, shape index: {}]
  %s2 = inlined_call_operand.vmem [shape: f32[16,2], index: 2, kind: input, shape index: {}]
  %s3 = inlined_call_operand.vmem [shape: f32[16,128], index: 3, kind: output, shape index: {}]
  %s4 = sld [smem:[#allocation0]]
  $region57: #{basic_ext_forward.1} parent=0
    _
  %s6 = ssub.s32 1, %s4
  %s7 = scalar_select 0, %s6, %s4
  loop: start=0, step=1, limit=4
  $region2: #{basic_ext_forward.1} parent=0 // loop_pre_header
    _
  $region3: #{basic_ext_forward.1} parent=0 // loop_header
    %s9 = sphi 0, %s13
    %p10 = scmp.ge.s32.totalorder %s9, 4
    %s16 = sphi 0, %s28
    %s17 = sphi 0, %s24
    %s18 = sphi 0, %s16
    %s19 = sphi 0, %s17
    %s20 = sphi 0, %s18
    %s21 = sphi 0, %s19
    %s31 = sphi 0, %s33
    %s34 = sphi 0, %s31
    %s35 = sphi 0, %s34
    %s51 = sphi 0, %s35
    %s55 = sphi 0, %s55
    %s57 = sphi 0, %s55
    %s58 = sphi 0, %s57
    %s72 = sphi 0, %s58
    %s76 = sphi 0, %s76
    %s78 = sphi 0, %s76
    %s79 = sphi 0, %s78
    %s93 = sphi 0, %s79
    %s99 = sphi 0, %s101
    %s102 = sphi 0, %s99
    %s103 = sphi 0, %s102
    %s119 = sphi 0, %s103
  $region4: #{basic_ext_forward.1} parent=0 // loop_header_branch
    %12 = sbr.rel (%p10) target = $region8
  $region5: #{basic_ext_forward.1} parent=0 // loop_body
    %s14 = ssub.s32 %s9, 1
    %s15 = ssub.s32 %s9, 2
    %s22 = sadd.s32 1, %s17
    %p23 = scmp.ge.s32.totalorder %s22, 1
    %s24 = scalar_select %p23, 0, %s22
    %s25 = sadd.s32 1, %s16
    %s26 = scalar_select %p23, %s25, %s16
    %p27 = scmp.ge.s32.totalorder %s26, 2
    %s28 = scalar_select %p27, 0, %s26
    %s29 = ssub.s32 %s17, %s24
    %p30 = scmp.eq.s32.totalorder %s29, 0
    %s32 = sadd.s32 %s31, 1
    %s33 = scalar_select %p30, %s31, %s32
    %p36 = pneg %p30
    %p37 = scmp.eq.s32.totalorder %s9, 1
    %p38 = por %p36, %p37
    %p39 = scmp.ne.s32.totalorder %s31, %s34
    %p40 = scmp.eq.s32.totalorder %s9, 0
    %p41 = por %p39, %p40
    %p42 = scmp.ne.s32.totalorder %s31, %s34
    %p43 = scmp.eq.s32.totalorder %s14, 1
    %p44 = por %p42, %p43
    %p45 = scmp.ne.s32.totalorder %s34, %s35
    %p46 = scmp.eq.s32.totalorder %s14, 0
    %p47 = por %p45, %p46
    %p48 = scmp.ne.s32.totalorder %s34, %s35
    %p49 = scmp.eq.s32.totalorder %s15, 1
    %p50 = por %p48, %p49
    %p52 = scmp.ne.s32.totalorder %s35, %s51
    %p53 = scmp.eq.s32.totalorder %s15, 0
    %p54 = por %p52, %p53
    %s56 = sadd.s32 %s55, 1
    %p59 = scmp.eq.s32.totalorder %s9, 1
    %p60 = scmp.ne.s32.totalorder %s55, %s57
    %p61 = scmp.eq.s32.totalorder %s9, 0
    %p62 = por %p60, %p61
    %p63 = scmp.ne.s32.totalorder %s55, %s57
    %p64 = scmp.eq.s32.totalorder %s14, 1
    %p65 = por %p63, %p64
    %p66 = scmp.ne.s32.totalorder %s57, %s58
    %p67 = scmp.eq.s32.totalorder %s14, 0
    %p68 = por %p66, %p67
    %p69 = scmp.ne.s32.totalorder %s57, %s58
    %p70 = scmp.eq.s32.totalorder %s15, 1
    %p71 = por %p69, %p70
    %p73 = scmp.ne.s32.totalorder %s58, %s72
    %p74 = scmp.eq.s32.totalorder %s15, 0
    %p75 = por %p73, %p74
    %s77 = sadd.s32 %s76, 1
    %p80 = scmp.eq.s32.totalorder %s9, 1
    %p81 = scmp.ne.s32.totalorder %s76, %s78
    %p82 = scmp.eq.s32.totalorder %s9, 0
    %p83 = por %p81, %p82
    %p84 = scmp.ne.s32.totalorder %s76, %s78
    %p85 = scmp.eq.s32.totalorder %s14, 1
    %p86 = por %p84, %p85
    %p87 = scmp.ne.s32.totalorder %s78, %s79
    %p88 = scmp.eq.s32.totalorder %s14, 0
    %p89 = por %p87, %p88
    %p90 = scmp.ne.s32.totalorder %s78, %s79
    %p91 = scmp.eq.s32.totalorder %s15, 1
    %p92 = por %p90, %p91
    %p94 = scmp.ne.s32.totalorder %s79, %s93
    %p95 = scmp.eq.s32.totalorder %s15, 0
    %p96 = por %p94, %p95
    %s97 = ssub.s32 %s17, %s24
    %p98 = scmp.eq.s32.totalorder %s97, 0
    %s100 = sadd.s32 %s99, 1
    %s101 = scalar_select %p98, %s99, %s100
    %p104 = pneg %p98
    %p105 = scmp.eq.s32.totalorder %s9, 1
    %p106 = por %p104, %p105
    %p107 = scmp.ne.s32.totalorder %s99, %s102
    %p108 = scmp.eq.s32.totalorder %s9, 0
    %p109 = por %p107, %p108
    %p110 = scmp.ne.s32.totalorder %s99, %s102
    %p111 = scmp.eq.s32.totalorder %s14, 1
    %p112 = por %p110, %p111
    %p113 = scmp.ne.s32.totalorder %s102, %s103
    %p114 = scmp.eq.s32.totalorder %s14, 0
    %p115 = por %p113, %p114
    %p116 = scmp.ne.s32.totalorder %s102, %s103
    %p117 = scmp.eq.s32.totalorder %s15, 1
    %p118 = por %p116, %p117
    %p120 = scmp.ne.s32.totalorder %s103, %s119
    %p121 = scmp.eq.s32.totalorder %s15, 0
    %p122 = por %p120, %p121
    %p123 = scmp.le.s32.totalorder 1, %s9
    %p124 = scmp.lt.s32.totalorder %s9, 3
    %p125 = pnand %p123, %p124
    %p126 = pneg %p125
    // Predicated region
    $region9: #{basic_ext_forward.1} parent=5 // pred_check
      _
    $region10: #{basic_ext_forward.1} parent=5 // pred_check_branch
      %128 = sbr.rel (%p125) target = $region12
    $region11: #{basic_ext_forward.1} parent=5 // pred_region
      %s129 = ssub.s32 %s9, 1
      // Predicated region
      $region13: #{basic_ext_forward.1} parent=11 // pred_check
        %p130 = pneg %p47
      $region14: #{basic_ext_forward.1} parent=11 // pred_check_branch
        %132 = sbr.rel (%p130) target = $region16
      $region15: #{basic_ext_forward.1} parent=11 // pred_region
        %p133 = scmp.lt.s32.totalorder %s19, 0
        %s134 = scalar_select %p133, %s19, 0
        %s135 = smul.addr %s134, 8
        %s136 = scalar_lea.vmem %s0, %s135
      $region16: #{basic_ext_forward.1} parent=11 // pred_fallthru
        _
      // Predicated region
      $region17: #{basic_ext_forward.1} parent=11 // pred_check
        %p137 = pneg %p68
      $region18: #{basic_ext_forward.1} parent=11 // pred_check_branch
        %139 = sbr.rel (%p137) target = $region20
      $region19: #{basic_ext_forward.1} parent=11 // pred_region
        _
      $region20: #{basic_ext_forward.1} parent=11 // pred_fallthru
        _
      // Predicated region
      $region21: #{basic_ext_forward.1} parent=11 // pred_check
        %p140 = pneg %p89
      $region22: #{basic_ext_forward.1} parent=11 // pred_check_branch
        %142 = sbr.rel (%p140) target = $region24
      $region23: #{basic_ext_forward.1} parent=11 // pred_region
        _
      $region24: #{basic_ext_forward.1} parent=11 // pred_fallthru
        _
    $region12: #{basic_ext_forward.1} parent=5 // pred_fallthru
      _
    %p143 = scmp.lt.s32.totalorder %s9, 2
    // Predicated region
    $region25: #{basic_ext_forward.1} parent=5 // pred_check
      %p144 = pneg %p143
    $region26: #{basic_ext_forward.1} parent=5 // pred_check_branch
      %146 = sbr.rel (%p144) target = $region28
    $region27: #{basic_ext_forward.1} parent=5 // pred_region
      _
    $region28: #{basic_ext_forward.1} parent=5 // pred_fallthru
      _
    %p147 = scmp.le.s32.totalorder 1, %s9
    %p148 = scmp.lt.s32.totalorder %s9, 3
    %p149 = pnand %p147, %p148
    %p150 = pneg %p149
    // Predicated region
    $region29: #{basic_ext_forward.1} parent=5 // pred_check
      _
    $region30: #{basic_ext_forward.1} parent=5 // pred_check_branch
      %152 = sbr.rel (%p149) target = $region32
    $region31: #{basic_ext_forward.1} parent=5 // pred_region
      %s153 = ssub.s32 %s9, 1
      %p154 = scmp.lt.s32.totalorder %s19, 0
      %s155 = scalar_select %p154, %s19, 0
      %s156 = smul.addr %s155, 8
      %s157 = scalar_lea.vmem %s0, %s156
      %p158 = pneg %p47
      %p159 = pneg %p44
      %p160 = pneg %p68
      %p161 = pneg %p65
      %p162 = pneg %p89
      %p163 = pneg %p86
      %p164 = pneg %p115
      %p165 = pneg %p112
      %p166 = scmp.lt.s32.totalorder %s19, 0
      %s167 = scalar_select %p166, %s19, 0
      %s168 = smul.addr %s167, 8
      %s169 = scalar_lea.vmem %s3, %s168
      %p170 = scmp.lt.s32.totalorder %s19, 0
      %s171 = scalar_select %p170, %s19, 0
      %s172 = smul.addr %s171, 8
      %s173 = scalar_lea.vmem %s0, %s172
      %p174 = scmp.lt.s32.totalorder %s19, 0
      %s175 = scalar_select %p174, %s19, 0
      %s176 = smul.addr %s175, 8
      %s177 = scalar_lea.vmem %s3, %s176
      %v178 = vld [vmem:[%s1] sm:$0xff]
      %v179 = vld [vmem:[%s1 + $0x8] sm:$0xff]
      %p180 = scmp.eq.s32.totalorder %s18, 0
      %p181 = scmp.eq.s32.totalorder %s19, 0
      %p182 = pnand %p180, %p181
      %p183 = pneg %p182
      // Predicated region
      $region33: #{basic_ext_forward.1} parent=31 // pred_check
        _
      $region34: #{basic_ext_forward.1} parent=31 // pred_check_branch
        %185 = sbr.rel (%p182) target = $region36
      $region35: #{basic_ext_forward.1} parent=31 // pred_region
        %vm186 = vcmask 7168
        %187 = vst.msk [vmem:[#allocation2] sm:$0xff] %vm186, 0.0
        %188 = vst.msk [vmem:[#allocation2 + $0x8] sm:$0xff] %vm186, 0.0
        %189 = vst.msk [vmem:[#allocation3] sm:$0xff] %vm186, 0.0
        %190 = vst.msk [vmem:[#allocation3 + $0x8] sm:$0xff] %vm186, 0.0
      $region36: #{basic_ext_forward.1} parent=31 // pred_fallthru
        _
      // Predicated region
      $region37: #{basic_ext_forward.1} parent=31 // pred_check
        %p191 = pneg %p180
      $region38: #{basic_ext_forward.1} parent=31 // pred_check_branch
        %193 = sbr.rel (%p191) target = $region40
      $region39: #{basic_ext_forward.1} parent=31 // pred_region
        %v194 = vld [vmem:[%s173] sm:$0xff]
        %v195 = vld [vmem:[%s173 + $0x8] sm:$0xff]
        %v196 = vld [vmem:[%s173 + $0x10] sm:$0xff]
        %v197 = vld [vmem:[%s173 + $0x18] sm:$0xff]
        %v198 = vld [vmem:[%s173 + $0x20] sm:$0xff]
        %v199 = vld [vmem:[%s173 + $0x28] sm:$0xff]
        %v200 = vld [vmem:[%s173 + $0x30] sm:$0xff]
        %v201 = vld [vmem:[%s173 + $0x38] sm:$0xff]
        %v202 = vld [vmem:[%s173 + $0x40] sm:$0xff]
        %v203 = vld [vmem:[%s173 + $0x48] sm:$0xff]
        %v204 = vld [vmem:[%s173 + $0x50] sm:$0xff]
        %v205 = vld [vmem:[%s173 + $0x58] sm:$0xff]
        %v206 = vld [vmem:[%s173 + $0x60] sm:$0xff]
        %v207 = vld [vmem:[%s173 + $0x68] sm:$0xff]
        %v208 = vld [vmem:[%s173 + $0x70] sm:$0xff]
        %v209 = vld [vmem:[%s173 + $0x78] sm:$0xff]
        %210 = vmatprep.subr.mxu0 0.0
        %211 = vmatpush1.msra.mxu0 %v209
        %212 = vmatprep.subr.mxu0 0.0
        %213 = vmatpush1.msra.mxu0 %v208
        %214 = vmatprep.subr.mxu0 0.0
        %215 = vmatpush1.msra.mxu0 %v207
        %216 = vmatprep.subr.mxu0 0.0
        %217 = vmatpush1.msra.mxu0 %v206
        %218 = vmatprep.subr.mxu0 0.0
        %219 = vmatpush1.msra.mxu0 %v205
        %220 = vmatprep.subr.mxu0 0.0
        %221 = vmatpush1.msra.mxu0 %v204
        %222 = vmatprep.subr.mxu0 0.0
        %223 = vmatpush1.msra.mxu0 %v203
        %224 = vmatprep.subr.mxu0 0.0
        %225 = vmatpush1.msra.mxu0 %v202
        %226 = vmatprep.subr.mxu0 0.0
        %227 = vmatpush1.msra.mxu0 %v201
        %228 = vmatprep.subr.mxu0 0.0
        %229 = vmatpush1.msra.mxu0 %v200
        %230 = vmatprep.subr.mxu0 0.0
        %231 = vmatpush1.msra.mxu0 %v199
        %232 = vmatprep.subr.mxu0 0.0
        %233 = vmatpush1.msra.mxu0 %v198
        %234 = vmatprep.subr.mxu0 0.0
        %235 = vmatpush1.msra.mxu0 %v197
        %236 = vmatprep.subr.mxu0 0.0
        %237 = vmatpush1.msra.mxu0 %v196
        %238 = vmatprep.subr.mxu0 0.0
        %239 = vmatpush1.msra.mxu0 %v195
        %240 = vmatprep.subr.mxu0 0.0
        %241 = vmatpush1.msra.mxu0 %v194
        %242 = vmatprep.subr.mxu0 0.0
        %243 = vmatpush2.msra.mxu0 0.0
        %244 = vmatprep.subr.mxu0 0.0
        %245 = vmatpush2.msra.mxu0 0.0
        %246 = vmatprep.subr.mxu0 0.0
        %247 = vmatpush2.msra.mxu0 0.0
        %248 = vmatprep.subr.mxu0 0.0
        %249 = vmatpush2.msra.mxu0 0.0
        %250 = vmatprep.subr.mxu0 0.0
        %251 = vmatpush2.msra.mxu0 0.0
        %252 = vmatprep.subr.mxu0 0.0
        %253 = vmatpush2.msra.mxu0 0.0
        %254 = vmatprep.subr.mxu0 0.0
        %255 = vmatpush2.msra.mxu0 0.0
        %256 = vmatprep.subr.mxu0 0.0
        %257 = vmatpush2.msra.mxu0 0.0
        %258 = vmatprep.subr.mxu0 0.0
        %259 = vmatpush2.msra.mxu0 0.0
        %260 = vmatprep.subr.mxu0 0.0
        %261 = vmatpush2.msra.mxu0 0.0
        %262 = vmatprep.subr.mxu0 0.0
        %263 = vmatpush2.msra.mxu0 0.0
        %264 = vmatprep.subr.mxu0 0.0
        %265 = vmatpush2.msra.mxu0 0.0
        %266 = vmatprep.subr.mxu0 0.0
        %267 = vmatpush2.msra.mxu0 0.0
        %268 = vmatprep.subr.mxu0 0.0
        %269 = vmatpush2.msra.mxu0 0.0
        %270 = vmatprep.subr.mxu0 0.0
        %271 = vmatpush2.msra.mxu0 0.0
        %272 = vmatprep.subr.mxu0 0.0
        %273 = vmatpush2.msra.mxu0 0.0
        %274 = vmatprep.mubr.f32.mxu0 0.0
        %275 = vmatmul.mubr.f32.gmra.mxu0 %v178
        %v276 = vpop.f32.mrf.mxu0
        %v277 = vadd.f32 0.0, %v276
        %v278 = vpop.f32.mrf.mxu0
        %279 = vmatprep.mubr.f32.mxu0 0.0
        %280 = vmatmul.mubr.f32.gmra.mxu0 %v179
        %v281 = vpop.f32.mrf.mxu0
        %v282 = vadd.f32 0.0, %v281
        %v283 = vpop.f32.mrf.mxu0
        %284 = vdwg.mxu0
        %285 = vadd.xlane.f32.xlu0 %v277
        %v286 = vpop.xlane.xlu0 %285
        %287 = vadd.xlane.f32.xlu0 %v282
        %v288 = vpop.xlane.xlu0 %287
        %v289 = vadd.f32 %v286, 0.0
        %v290 = vadd.f32 %v288, 0.0
        %v291 = vmul.f32 %v277, %v277
        %v292 = vmul.f32 %v282, %v282
        %293 = vadd.xlane.f32.xlu0 %v291
        %v294 = vpop.xlane.xlu0 %293
        %295 = vadd.xlane.f32.xlu0 %v292
        %v296 = vpop.xlane.xlu0 %295
        %v297 = vadd.f32 %v294, 0.0
        %v298 = vadd.f32 %v296, 0.0
        %s299 = scalar_lea.vmem %s173, 128
        %v300 = vld [vmem:[%s299] sm:$0xff]
        %v301 = vld [vmem:[%s299 + $0x8] sm:$0xff]
        %v302 = vld [vmem:[%s299 + $0x10] sm:$0xff]
        %v303 = vld [vmem:[%s299 + $0x18] sm:$0xff]
        %v304 = vld [vmem:[%s299 + $0x20] sm:$0xff]
        %v305 = vld [vmem:[%s299 + $0x28] sm:$0xff]
        %v306 = vld [vmem:[%s299 + $0x30] sm:$0xff]
        %v307 = vld [vmem:[%s299 + $0x38] sm:$0xff]
        %v308 = vld [vmem:[%s299 + $0x40] sm:$0xff]
        %v309 = vld [vmem:[%s299 + $0x48] sm:$0xff]
        %v310 = vld [vmem:[%s299 + $0x50] sm:$0xff]
        %v311 = vld [vmem:[%s299 + $0x58] sm:$0xff]
        %v312 = vld [vmem:[%s299 + $0x60] sm:$0xff]
        %v313 = vld [vmem:[%s299 + $0x68] sm:$0xff]
        %v314 = vld [vmem:[%s299 + $0x70] sm:$0xff]
        %v315 = vld [vmem:[%s299 + $0x78] sm:$0xff]
        %316 = vmatprep.subr.mxu0 0.0
        %317 = vmatpush1.msra.mxu0 %v315
        %318 = vmatprep.subr.mxu0 0.0
        %319 = vmatpush1.msra.mxu0 %v314
        %320 = vmatprep.subr.mxu0 0.0
        %321 = vmatpush1.msra.mxu0 %v313
        %322 = vmatprep.subr.mxu0 0.0
        %323 = vmatpush1.msra.mxu0 %v312
        %324 = vmatprep.subr.mxu0 0.0
        %325 = vmatpush1.msra.mxu0 %v311
        %326 = vmatprep.subr.mxu0 0.0
        %327 = vmatpush1.msra.mxu0 %v310
        %328 = vmatprep.subr.mxu0 0.0
        %329 = vmatpush1.msra.mxu0 %v309
        %330 = vmatprep.subr.mxu0 0.0
        %331 = vmatpush1.msra.mxu0 %v308
        %332 = vmatprep.subr.mxu0 0.0
        %333 = vmatpush1.msra.mxu0 %v307
        %334 = vmatprep.subr.mxu0 0.0
        %335 = vmatpush1.msra.mxu0 %v306
        %336 = vmatprep.subr.mxu0 0.0
        %337 = vmatpush1.msra.mxu0 %v305
        %338 = vmatprep.subr.mxu0 0.0
        %339 = vmatpush1.msra.mxu0 %v304
        %340 = vmatprep.subr.mxu0 0.0
        %341 = vmatpush1.msra.mxu0 %v303
        %342 = vmatprep.subr.mxu0 0.0
        %343 = vmatpush1.msra.mxu0 %v302
        %344 = vmatprep.subr.mxu0 0.0
        %345 = vmatpush1.msra.mxu0 %v301
        %346 = vmatprep.subr.mxu0 0.0
        %347 = vmatpush1.msra.mxu0 %v300
        %348 = vmatprep.subr.mxu0 0.0
        %349 = vmatpush2.msra.mxu0 0.0
        %350 = vmatprep.subr.mxu0 0.0
        %351 = vmatpush2.msra.mxu0 0.0
        %352 = vmatprep.subr.mxu0 0.0
        %353 = vmatpush2.msra.mxu0 0.0
        %354 = vmatprep.subr.mxu0 0.0
        %355 = vmatpush2.msra.mxu0 0.0
        %356 = vmatprep.subr.mxu0 0.0
        %357 = vmatpush2.msra.mxu0 0.0
        %358 = vmatprep.subr.mxu0 0.0
        %359 = vmatpush2.msra.mxu0 0.0
        %360 = vmatprep.subr.mxu0 0.0
        %361 = vmatpush2.msra.mxu0 0.0
        %362 = vmatprep.subr.mxu0 0.0
        %363 = vmatpush2.msra.mxu0 0.0
        %364 = vmatprep.subr.mxu0 0.0
        %365 = vmatpush2.msra.mxu0 0.0
        %366 = vmatprep.subr.mxu0 0.0
        %367 = vmatpush2.msra.mxu0 0.0
        %368 = vmatprep.subr.mxu0 0.0
        %369 = vmatpush2.msra.mxu0 0.0
        %370 = vmatprep.subr.mxu0 0.0
        %371 = vmatpush2.msra.mxu0 0.0
        %372 = vmatprep.subr.mxu0 0.0
        %373 = vmatpush2.msra.mxu0 0.0
        %374 = vmatprep.subr.mxu0 0.0
        %375 = vmatpush2.msra.mxu0 0.0
        %376 = vmatprep.subr.mxu0 0.0
        %377 = vmatpush2.msra.mxu0 0.0
        %378 = vmatprep.subr.mxu0 0.0
        %379 = vmatpush2.msra.mxu0 0.0
        %380 = vmatprep.mubr.f32.mxu0 0.0
        %381 = vmatmul.mubr.f32.gmra.mxu0 %v178
        %v382 = vpop.f32.mrf.mxu0
        %v383 = vadd.f32 0.0, %v382
        %v384 = vpop.f32.mrf.mxu0
        %385 = vmatprep.mubr.f32.mxu0 0.0
        %386 = vmatmul.mubr.f32.gmra.mxu0 %v179
        %v387 = vpop.f32.mrf.mxu0
        %v388 = vadd.f32 0.0, %v387
        %v389 = vpop.f32.mrf.mxu0
        %390 = vdwg.mxu0
        %391 = vadd.xlane.f32.xlu0 %v383
        %v392 = vpop.xlane.xlu0 %391
        %393 = vadd.xlane.f32.xlu0 %v388
        %v394 = vpop.xlane.xlu0 %393
        %v395 = vadd.f32 %v289, %v392
        %v396 = vadd.f32 %v290, %v394
        %v397 = vmul.f32 %v383, %v383
        %v398 = vmul.f32 %v388, %v388
        %399 = vadd.xlane.f32.xlu0 %v397
        %v400 = vpop.xlane.xlu0 %399
        %401 = vadd.xlane.f32.xlu0 %v398
        %v402 = vpop.xlane.xlu0 %401
        %v403 = vadd.f32 %v297, %v400
        %v404 = vadd.f32 %v298, %v402
        %s405 = scalar_lea.vmem %s173, 256
        %v406 = vld [vmem:[%s405] sm:$0xff]
        %v407 = vld [vmem:[%s405 + $0x8] sm:$0xff]
        %v408 = vld [vmem:[%s405 + $0x10] sm:$0xff]
        %v409 = vld [vmem:[%s405 + $0x18] sm:$0xff]
        %v410 = vld [vmem:[%s405 + $0x20] sm:$0xff]
        %v411 = vld [vmem:[%s405 + $0x28] sm:$0xff]
        %v412 = vld [vmem:[%s405 + $0x30] sm:$0xff]
        %v413 = vld [vmem:[%s405 + $0x38] sm:$0xff]
        %v414 = vld [vmem:[%s405 + $0x40] sm:$0xff]
        %v415 = vld [vmem:[%s405 + $0x48] sm:$0xff]
        %v416 = vld [vmem:[%s405 + $0x50] sm:$0xff]
        %v417 = vld [vmem:[%s405 + $0x58] sm:$0xff]
        %v418 = vld [vmem:[%s405 + $0x60] sm:$0xff]
        %v419 = vld [vmem:[%s405 + $0x68] sm:$0xff]
        %v420 = vld [vmem:[%s405 + $0x70] sm:$0xff]
        %v421 = vld [vmem:[%s405 + $0x78] sm:$0xff]
        %422 = vmatprep.subr.mxu0 0.0
        %423 = vmatpush1.msra.mxu0 %v421
        %424 = vmatprep.subr.mxu0 0.0
        %425 = vmatpush1.msra.mxu0 %v420
        %426 = vmatprep.subr.mxu0 0.0
        %427 = vmatpush1.msra.mxu0 %v419
        %428 = vmatprep.subr.mxu0 0.0
        %429 = vmatpush1.msra.mxu0 %v418
        %430 = vmatprep.subr.mxu0 0.0
        %431 = vmatpush1.msra.mxu0 %v417
        %432 = vmatprep.subr.mxu0 0.0
        %433 = vmatpush1.msra.mxu0 %v416
        %434 = vmatprep.subr.mxu0 0.0
        %435 = vmatpush1.msra.mxu0 %v415
        %436 = vmatprep.subr.mxu0 0.0
        %437 = vmatpush1.msra.mxu0 %v414
        %438 = vmatprep.subr.mxu0 0.0
        %439 = vmatpush1.msra.mxu0 %v413
        %440 = vmatprep.subr.mxu0 0.0
        %441 = vmatpush1.msra.mxu0 %v412
        %442 = vmatprep.subr.mxu0 0.0
        %443 = vmatpush1.msra.mxu0 %v411
        %444 = vmatprep.subr.mxu0 0.0
        %445 = vmatpush1.msra.mxu0 %v410
        %446 = vmatprep.subr.mxu0 0.0
        %447 = vmatpush1.msra.mxu0 %v409
        %448 = vmatprep.subr.mxu0 0.0
        %449 = vmatpush1.msra.mxu0 %v408
        %450 = vmatprep.subr.mxu0 0.0
        %451 = vmatpush1.msra.mxu0 %v407
        %452 = vmatprep.subr.mxu0 0.0
        %453 = vmatpush1.msra.mxu0 %v406
        %454 = vmatprep.subr.mxu0 0.0
        %455 = vmatpush2.msra.mxu0 0.0
        %456 = vmatprep.subr.mxu0 0.0
        %457 = vmatpush2.msra.mxu0 0.0
        %458 = vmatprep.subr.mxu0 0.0
        %459 = vmatpush2.msra.mxu0 0.0
        %460 = vmatprep.subr.mxu0 0.0
        %461 = vmatpush2.msra.mxu0 0.0
        %462 = vmatprep.subr.mxu0 0.0
        %463 = vmatpush2.msra.mxu0 0.0
        %464 = vmatprep.subr.mxu0 0.0
        %465 = vmatpush2.msra.mxu0 0.0
        %466 = vmatprep.subr.mxu0 0.0
        %467 = vmatpush2.msra.mxu0 0.0
        %468 = vmatprep.subr.mxu0 0.0
        %469 = vmatpush2.msra.mxu0 0.0
        %470 = vmatprep.subr.mxu0 0.0
        %471 = vmatpush2.msra.mxu0 0.0
        %472 = vmatprep.subr.mxu0 0.0
        %473 = vmatpush2.msra.mxu0 0.0
        %474 = vmatprep.subr.mxu0 0.0
        %475 = vmatpush2.msra.mxu0 0.0
        %476 = vmatprep.subr.mxu0 0.0
        %477 = vmatpush2.msra.mxu0 0.0
        %478 = vmatprep.subr.mxu0 0.0
        %479 = vmatpush2.msra.mxu0 0.0
        %480 = vmatprep.subr.mxu0 0.0
        %481 = vmatpush2.msra.mxu0 0.0
        %482 = vmatprep.subr.mxu0 0.0
        %483 = vmatpush2.msra.mxu0 0.0
        %484 = vmatprep.subr.mxu0 0.0
        %485 = vmatpush2.msra.mxu0 0.0
        %486 = vmatprep.mubr.f32.mxu0 0.0
        %487 = vmatmul.mubr.f32.gmra.mxu0 %v178
        %v488 = vpop.f32.mrf.mxu0
        %v489 = vadd.f32 0.0, %v488
        %v490 = vpop.f32.mrf.mxu0
        %491 = vmatprep.mubr.f32.mxu0 0.0
        %492 = vmatmul.mubr.f32.gmra.mxu0 %v179
        %v493 = vpop.f32.mrf.mxu0
        %v494 = vadd.f32 0.0, %v493
        %v495 = vpop.f32.mrf.mxu0
        %496 = vdwg.mxu0
        %497 = vadd.xlane.f32.xlu0 %v489
        %v498 = vpop.xlane.xlu0 %497
        %499 = vadd.xlane.f32.xlu0 %v494
        %v500 = vpop.xlane.xlu0 %499
        %v501 = vadd.f32 %v395, %v498
        %v502 = vadd.f32 %v396, %v500
        %v503 = vmul.f32 %v489, %v489
        %v504 = vmul.f32 %v494, %v494
        %505 = vadd.xlane.f32.xlu0 %v503
        %v506 = vpop.xlane.xlu0 %505
        %507 = vadd.xlane.f32.xlu0 %v504
        %v508 = vpop.xlane.xlu0 %507
        %v509 = vadd.f32 %v403, %v506
        %v510 = vadd.f32 %v404, %v508
        %s511 = scalar_lea.vmem %s173, 384
        %v512 = vld [vmem:[%s511] sm:$0xff]
        %v513 = vld [vmem:[%s511 + $0x8] sm:$0xff]
        %v514 = vld [vmem:[%s511 + $0x10] sm:$0xff]
        %v515 = vld [vmem:[%s511 + $0x18] sm:$0xff]
        %v516 = vld [vmem:[%s511 + $0x20] sm:$0xff]
        %v517 = vld [vmem:[%s511 + $0x28] sm:$0xff]
        %v518 = vld [vmem:[%s511 + $0x30] sm:$0xff]
        %v519 = vld [vmem:[%s511 + $0x38] sm:$0xff]
        %v520 = vld [vmem:[%s511 + $0x40] sm:$0xff]
        %v521 = vld [vmem:[%s511 + $0x48] sm:$0xff]
        %v522 = vld [vmem:[%s511 + $0x50] sm:$0xff]
        %v523 = vld [vmem:[%s511 + $0x58] sm:$0xff]
        %v524 = vld [vmem:[%s511 + $0x60] sm:$0xff]
        %v525 = vld [vmem:[%s511 + $0x68] sm:$0xff]
        %v526 = vld [vmem:[%s511 + $0x70] sm:$0xff]
        %v527 = vld [vmem:[%s511 + $0x78] sm:$0xff]
        %528 = vmatprep.subr.mxu0 0.0
        %529 = vmatpush1.msra.mxu0 %v527
        %530 = vmatprep.subr.mxu0 0.0
        %531 = vmatpush1.msra.mxu0 %v526
        %532 = vmatprep.subr.mxu0 0.0
        %533 = vmatpush1.msra.mxu0 %v525
        %534 = vmatprep.subr.mxu0 0.0
        %535 = vmatpush1.msra.mxu0 %v524
        %536 = vmatprep.subr.mxu0 0.0
        %537 = vmatpush1.msra.mxu0 %v523
        %538 = vmatprep.subr.mxu0 0.0
        %539 = vmatpush1.msra.mxu0 %v522
        %540 = vmatprep.subr.mxu0 0.0
        %541 = vmatpush1.msra.mxu0 %v521
        %542 = vmatprep.subr.mxu0 0.0
        %543 = vmatpush1.msra.mxu0 %v520
        %544 = vmatprep.subr.mxu0 0.0
        %545 = vmatpush1.msra.mxu0 %v519
        %546 = vmatprep.subr.mxu0 0.0
        %547 = vmatpush1.msra.mxu0 %v518
        %548 = vmatprep.subr.mxu0 0.0
        %549 = vmatpush1.msra.mxu0 %v517
        %550 = vmatprep.subr.mxu0 0.0
        %551 = vmatpush1.msra.mxu0 %v516
        %552 = vmatprep.subr.mxu0 0.0
        %553 = vmatpush1.msra.mxu0 %v515
        %554 = vmatprep.subr.mxu0 0.0
        %555 = vmatpush1.msra.mxu0 %v514
        %556 = vmatprep.subr.mxu0 0.0
        %557 = vmatpush1.msra.mxu0 %v513
        %558 = vmatprep.subr.mxu0 0.0
        %559 = vmatpush1.msra.mxu0 %v512
        %560 = vmatprep.subr.mxu0 0.0
        %561 = vmatpush2.msra.mxu0 0.0
        %562 = vmatprep.subr.mxu0 0.0
        %563 = vmatpush2.msra.mxu0 0.0
        %564 = vmatprep.subr.mxu0 0.0
        %565 = vmatpush2.msra.mxu0 0.0
        %566 = vmatprep.subr.mxu0 0.0
        %567 = vmatpush2.msra.mxu0 0.0
        %568 = vmatprep.subr.mxu0 0.0
        %569 = vmatpush2.msra.mxu0 0.0
        %570 = vmatprep.subr.mxu0 0.0
        %571 = vmatpush2.msra.mxu0 0.0
        %572 = vmatprep.subr.mxu0 0.0
        %573 = vmatpush2.msra.mxu0 0.0
        %574 = vmatprep.subr.mxu0 0.0
        %575 = vmatpush2.msra.mxu0 0.0
        %576 = vmatprep.subr.mxu0 0.0
        %577 = vmatpush2.msra.mxu0 0.0
        %578 = vmatprep.subr.mxu0 0.0
        %579 = vmatpush2.msra.mxu0 0.0
        %580 = vmatprep.subr.mxu0 0.0
        %581 = vmatpush2.msra.mxu0 0.0
        %582 = vmatprep.subr.mxu0 0.0
        %583 = vmatpush2.msra.mxu0 0.0
        %584 = vmatprep.subr.mxu0 0.0
        %585 = vmatpush2.msra.mxu0 0.0
        %586 = vmatprep.subr.mxu0 0.0
        %587 = vmatpush2.msra.mxu0 0.0
        %588 = vmatprep.subr.mxu0 0.0
        %589 = vmatpush2.msra.mxu0 0.0
        %590 = vmatprep.subr.mxu0 0.0
        %591 = vmatpush2.msra.mxu0 0.0
        %592 = vmatprep.mubr.f32.mxu0 0.0
        %593 = vmatmul.mubr.f32.gmra.mxu0 %v178
        %v594 = vpop.f32.mrf.mxu0
        %v595 = vadd.f32 0.0, %v594
        %v596 = vpop.f32.mrf.mxu0
        %597 = vmatprep.mubr.f32.mxu0 0.0
        %598 = vmatmul.mubr.f32.gmra.mxu0 %v179
        %v599 = vpop.f32.mrf.mxu0
        %v600 = vadd.f32 0.0, %v599
        %v601 = vpop.f32.mrf.mxu0
        %602 = vdwg.mxu0
        %603 = vadd.xlane.f32.xlu0 %v595
        %v604 = vpop.xlane.xlu0 %603
        %605 = vadd.xlane.f32.xlu0 %v600
        %v606 = vpop.xlane.xlu0 %605
        %v607 = vadd.f32 %v501, %v604
        %v608 = vadd.f32 %v502, %v606
        %v609 = vmul.f32 %v595, %v595
        %v610 = vmul.f32 %v600, %v600
        %611 = vadd.xlane.f32.xlu0 %v609
        %v612 = vpop.xlane.xlu0 %611
        %613 = vadd.xlane.f32.xlu0 %v610
        %v614 = vpop.xlane.xlu0 %613
        %v615 = vadd.f32 %v509, %v612
        %v616 = vadd.f32 %v510, %v614
        %v617 = vld [vmem:[#allocation2] sm:$0xff]
        %v618 = vld [vmem:[#allocation2 + $0x8] sm:$0xff]
        %v619 = vadd.f32 %v617, %v607
        %v620 = vadd.f32 %v618, %v608
        %vm621 = vcmask 7168
        %622 = vst.msk [vmem:[#allocation2] sm:$0xff] %vm621, %v619
        %623 = vst.msk [vmem:[#allocation2 + $0x8] sm:$0xff] %vm621, %v620
        %v624 = vld [vmem:[#allocation3] sm:$0xff]
        %v625 = vld [vmem:[#allocation3 + $0x8] sm:$0xff]
        %v626 = vadd.f32 %v624, %v615
        %v627 = vadd.f32 %v625, %v616
        %628 = vst.msk [vmem:[#allocation3] sm:$0xff] %vm621, %v626
        %629 = vst.msk [vmem:[#allocation3 + $0x8] sm:$0xff] %vm621, %v627
      $region40: #{basic_ext_forward.1} parent=31 // pred_fallthru
        _
      %p630 = scmp.eq.s32.totalorder %s18, 1
      // Predicated region
      $region41: #{basic_ext_forward.1} parent=31 // pred_check
        %p631 = pneg %p630
      $region42: #{basic_ext_forward.1} parent=31 // pred_check_branch
        %633 = sbr.rel (%p631) target = $region44
      $region43: #{basic_ext_forward.1} parent=31 // pred_region
        %v634 = vld [vmem:[#allocation2] sm:$0xff]
        %v635 = vld [vmem:[#allocation2 + $0x8] sm:$0xff]
        %v636 = vmul.f32 %v634, 0.001953125
        %v637 = vmul.f32 %v635, 0.001953125
        %v638 = vld [vmem:[#allocation3] sm:$0xff]
        %v639 = vld [vmem:[#allocation3 + $0x8] sm:$0xff]
        %v640 = vmul.f32 %v638, 0.001953125
        %v641 = vmul.f32 %v639, 0.001953125
        %v642 = vmul.f32 %v636, %v636
        %v643 = vmul.f32 %v637, %v637
        %v644 = vsub.f32 %v640, %v642
        %v645 = vsub.f32 %v641, %v643
        %v646 = vmax.f32 %v644, 0.0
        %v647 = vmax.f32 %v645, 0.0
        %v648 = vadd.f32 %v646, 1e-05
        %v649 = vadd.f32 %v647, 1e-05
        %v650 = vrsqrt.pop %v648
        %v651 = vrsqrt.pop %v649
        %v652 = vld [vmem:[%s2] sm:$0xff]
        %v653 = vld [vmem:[%s2 + $0x8] sm:$0xff]
        %v654 = vmul.f32 %v652, %v650
        %v655 = vmul.f32 %v653, %v651
        %v656 = vmul.f32 %v636, %v654
        %v657 = vmul.f32 %v637, %v655
        %660 = vrot.lane.b32.xlu0 %v656, 1
        %v661 = vpop.permute.xlu0 %660
        %662 = vrot.lane.b32.xlu0 %v657, 1
        %v663 = vpop.permute.xlu0 %662
        %v666 = vsub.f32 %v652, %v661
        %v667 = vsub.f32 %v653, %v663
        %v668 = vld [vmem:[%s173] sm:$0xff]
        %v669 = vld [vmem:[%s173 + $0x8] sm:$0xff]
        %v670 = vld [vmem:[%s173 + $0x10] sm:$0xff]
        %v671 = vld [vmem:[%s173 + $0x18] sm:$0xff]
        %v672 = vld [vmem:[%s173 + $0x20] sm:$0xff]
        %v673 = vld [vmem:[%s173 + $0x28] sm:$0xff]
        %v674 = vld [vmem:[%s173 + $0x30] sm:$0xff]
        %v675 = vld [vmem:[%s173 + $0x38] sm:$0xff]
        %v676 = vld [vmem:[%s173 + $0x40] sm:$0xff]
        %v677 = vld [vmem:[%s173 + $0x48] sm:$0xff]
        %v678 = vld [vmem:[%s173 + $0x50] sm:$0xff]
        %v679 = vld [vmem:[%s173 + $0x58] sm:$0xff]
        %v680 = vld [vmem:[%s173 + $0x60] sm:$0xff]
        %v681 = vld [vmem:[%s173 + $0x68] sm:$0xff]
        %v682 = vld [vmem:[%s173 + $0x70] sm:$0xff]
        %v683 = vld [vmem:[%s173 + $0x78] sm:$0xff]
        %684 = vmatprep.subr.mxu0 0.0
        %685 = vmatpush1.msra.mxu0 %v683
        %686 = vmatprep.subr.mxu0 0.0
        %687 = vmatpush1.msra.mxu0 %v682
        %688 = vmatprep.subr.mxu0 0.0
        %689 = vmatpush1.msra.mxu0 %v681
        %690 = vmatprep.subr.mxu0 0.0
        %691 = vmatpush1.msra.mxu0 %v680
        %692 = vmatprep.subr.mxu0 0.0
        %693 = vmatpush1.msra.mxu0 %v679
        %694 = vmatprep.subr.mxu0 0.0
        %695 = vmatpush1.msra.mxu0 %v678
        %696 = vmatprep.subr.mxu0 0.0
        %697 = vmatpush1.msra.mxu0 %v677
        %698 = vmatprep.subr.mxu0 0.0
        %699 = vmatpush1.msra.mxu0 %v676
        %700 = vmatprep.subr.mxu0 0.0
        %701 = vmatpush1.msra.mxu0 %v675
        %702 = vmatprep.subr.mxu0 0.0
        %703 = vmatpush1.msra.mxu0 %v674
        %704 = vmatprep.subr.mxu0 0.0
        %705 = vmatpush1.msra.mxu0 %v673
        %706 = vmatprep.subr.mxu0 0.0
        %707 = vmatpush1.msra.mxu0 %v672
        %708 = vmatprep.subr.mxu0 0.0
        %709 = vmatpush1.msra.mxu0 %v671
        %710 = vmatprep.subr.mxu0 0.0
        %711 = vmatpush1.msra.mxu0 %v670
        %712 = vmatprep.subr.mxu0 0.0
        %713 = vmatpush1.msra.mxu0 %v669
        %714 = vmatprep.subr.mxu0 0.0
        %715 = vmatpush1.msra.mxu0 %v668
        %716 = vmatprep.subr.mxu0 0.0
        %717 = vmatpush2.msra.mxu0 0.0
        %718 = vmatprep.subr.mxu0 0.0
        %719 = vmatpush2.msra.mxu0 0.0
        %720 = vmatprep.subr.mxu0 0.0
        %721 = vmatpush2.msra.mxu0 0.0
        %722 = vmatprep.subr.mxu0 0.0
        %723 = vmatpush2.msra.mxu0 0.0
        %724 = vmatprep.subr.mxu0 0.0
        %725 = vmatpush2.msra.mxu0 0.0
        %726 = vmatprep.subr.mxu0 0.0
        %727 = vmatpush2.msra.mxu0 0.0
        %728 = vmatprep.subr.mxu0 0.0
        %729 = vmatpush2.msra.mxu0 0.0
        %730 = vmatprep.subr.mxu0 0.0
        %731 = vmatpush2.msra.mxu0 0.0
        %732 = vmatprep.subr.mxu0 0.0
        %733 = vmatpush2.msra.mxu0 0.0
        %734 = vmatprep.subr.mxu0 0.0
        %735 = vmatpush2.msra.mxu0 0.0
        %736 = vmatprep.subr.mxu0 0.0
        %737 = vmatpush2.msra.mxu0 0.0
        %738 = vmatprep.subr.mxu0 0.0
        %739 = vmatpush2.msra.mxu0 0.0
        %740 = vmatprep.subr.mxu0 0.0
        %741 = vmatpush2.msra.mxu0 0.0
        %742 = vmatprep.subr.mxu0 0.0
        %743 = vmatpush2.msra.mxu0 0.0
        %744 = vmatprep.subr.mxu0 0.0
        %745 = vmatpush2.msra.mxu0 0.0
        %746 = vmatprep.subr.mxu0 0.0
        %747 = vmatpush2.msra.mxu0 0.0
        %748 = vmatprep.mubr.f32.mxu0 0.0
        %749 = vmatmul.mubr.f32.gmra.mxu0 %v178
        %v750 = vpop.f32.mrf.mxu0
        %v751 = vadd.f32 0.0, %v750
        %v752 = vpop.f32.mrf.mxu0
        %753 = vmatprep.mubr.f32.mxu0 0.0
        %754 = vmatmul.mubr.f32.gmra.mxu0 %v179
        %v755 = vpop.f32.mrf.mxu0
        %v756 = vadd.f32 0.0, %v755
        %v757 = vpop.f32.mrf.mxu0
        %758 = vdwg.mxu0
        %760 = vset.pattern.permute.xlu0 0
        %761 = vperm.xlu0 %760, %v654
        %v762 = vpop.permute.xlu0 %761
        %765 = vset.pattern.permute.xlu0 0
        %766 = vperm.xlu0 %765, %v655
        %v767 = vpop.permute.xlu0 %766
        %v769 = vmul.f32 %v751, %v762
        %v770 = vmul.f32 %v756, %v767
        %772 = vset.pattern.permute.xlu0 1
        %773 = vperm.xlu0 %772, %v666
        %v774 = vpop.permute.xlu0 %773
        %777 = vset.pattern.permute.xlu0 1
        %778 = vperm.xlu0 %777, %v667
        %v779 = vpop.permute.xlu0 %778
        %v781 = vadd.f32 %v769, %v774
        %v782 = vadd.f32 %v770, %v779
        %v783 = vmax.f32 %v781, 0.0
        %v784 = vmax.f32 %v782, 0.0
        %s785 = scalar_lea.vmem %s173, 128
        %v786 = vld [vmem:[%s785] sm:$0xff]
        %v787 = vld [vmem:[%s785 + $0x8] sm:$0xff]
        %v788 = vld [vmem:[%s785 + $0x10] sm:$0xff]
        %v789 = vld [vmem:[%s785 + $0x18] sm:$0xff]
        %v790 = vld [vmem:[%s785 + $0x20] sm:$0xff]
        %v791 = vld [vmem:[%s785 + $0x28] sm:$0xff]
        %v792 = vld [vmem:[%s785 + $0x30] sm:$0xff]
        %v793 = vld [vmem:[%s785 + $0x38] sm:$0xff]
        %v794 = vld [vmem:[%s785 + $0x40] sm:$0xff]
        %v795 = vld [vmem:[%s785 + $0x48] sm:$0xff]
        %v796 = vld [vmem:[%s785 + $0x50] sm:$0xff]
        %v797 = vld [vmem:[%s785 + $0x58] sm:$0xff]
        %v798 = vld [vmem:[%s785 + $0x60] sm:$0xff]
        %v799 = vld [vmem:[%s785 + $0x68] sm:$0xff]
        %v800 = vld [vmem:[%s785 + $0x70] sm:$0xff]
        %v801 = vld [vmem:[%s785 + $0x78] sm:$0xff]
        %802 = vmatprep.subr.mxu0 0.0
        %803 = vmatpush1.msra.mxu0 %v801
        %804 = vmatprep.subr.mxu0 0.0
        %805 = vmatpush1.msra.mxu0 %v800
        %806 = vmatprep.subr.mxu0 0.0
        %807 = vmatpush1.msra.mxu0 %v799
        %808 = vmatprep.subr.mxu0 0.0
        %809 = vmatpush1.msra.mxu0 %v798
        %810 = vmatprep.subr.mxu0 0.0
        %811 = vmatpush1.msra.mxu0 %v797
        %812 = vmatprep.subr.mxu0 0.0
        %813 = vmatpush1.msra.mxu0 %v796
        %814 = vmatprep.subr.mxu0 0.0
        %815 = vmatpush1.msra.mxu0 %v795
        %816 = vmatprep.subr.mxu0 0.0
        %817 = vmatpush1.msra.mxu0 %v794
        %818 = vmatprep.subr.mxu0 0.0
        %819 = vmatpush1.msra.mxu0 %v793
        %820 = vmatprep.subr.mxu0 0.0
        %821 = vmatpush1.msra.mxu0 %v792
        %822 = vmatprep.subr.mxu0 0.0
        %823 = vmatpush1.msra.mxu0 %v791
        %824 = vmatprep.subr.mxu0 0.0
        %825 = vmatpush1.msra.mxu0 %v790
        %826 = vmatprep.subr.mxu0 0.0
        %827 = vmatpush1.msra.mxu0 %v789
        %828 = vmatprep.subr.mxu0 0.0
        %829 = vmatpush1.msra.mxu0 %v788
        %830 = vmatprep.subr.mxu0 0.0
        %831 = vmatpush1.msra.mxu0 %v787
        %832 = vmatprep.subr.mxu0 0.0
        %833 = vmatpush1.msra.mxu0 %v786
        %834 = vmatprep.subr.mxu0 0.0
        %835 = vmatpush2.msra.mxu0 0.0
        %836 = vmatprep.subr.mxu0 0.0
        %837 = vmatpush2.msra.mxu0 0.0
        %838 = vmatprep.subr.mxu0 0.0
        %839 = vmatpush2.msra.mxu0 0.0
        %840 = vmatprep.subr.mxu0 0.0
        %841 = vmatpush2.msra.mxu0 0.0
        %842 = vmatprep.subr.mxu0 0.0
        %843 = vmatpush2.msra.mxu0 0.0
        %844 = vmatprep.subr.mxu0 0.0
        %845 = vmatpush2.msra.mxu0 0.0
        %846 = vmatprep.subr.mxu0 0.0
        %847 = vmatpush2.msra.mxu0 0.0
        %848 = vmatprep.subr.mxu0 0.0
        %849 = vmatpush2.msra.mxu0 0.0
        %850 = vmatprep.subr.mxu0 0.0
        %851 = vmatpush2.msra.mxu0 0.0
        %852 = vmatprep.subr.mxu0 0.0
        %853 = vmatpush2.msra.mxu0 0.0
        %854 = vmatprep.subr.mxu0 0.0
        %855 = vmatpush2.msra.mxu0 0.0
        %856 = vmatprep.subr.mxu0 0.0
        %857 = vmatpush2.msra.mxu0 0.0
        %858 = vmatprep.subr.mxu0 0.0
        %859 = vmatpush2.msra.mxu0 0.0
        %860 = vmatprep.subr.mxu0 0.0
        %861 = vmatpush2.msra.mxu0 0.0
        %862 = vmatprep.subr.mxu0 0.0
        %863 = vmatpush2.msra.mxu0 0.0
        %864 = vmatprep.subr.mxu0 0.0
        %865 = vmatpush2.msra.mxu0 0.0
        %866 = vmatprep.mubr.f32.mxu0 0.0
        %867 = vmatmul.mubr.f32.gmra.mxu0 %v178
        %v868 = vpop.f32.mrf.mxu0
        %v869 = vadd.f32 0.0, %v868
        %v870 = vpop.f32.mrf.mxu0
        %871 = vmatprep.mubr.f32.mxu0 0.0
        %872 = vmatmul.mubr.f32.gmra.mxu0 %v179
        %v873 = vpop.f32.mrf.mxu0
        %v874 = vadd.f32 0.0, %v873
        %v875 = vpop.f32.mrf.mxu0
        %876 = vdwg.mxu0
        %v877 = vmul.f32 %v869, %v762
        %v878 = vmul.f32 %v874, %v767
        %v879 = vadd.f32 %v877, %v774
        %v880 = vadd.f32 %v878, %v779
        %v881 = vmax.f32 %v879, 0.0
        %v882 = vmax.f32 %v880, 0.0
        %v883 = vmax.f32 %v783, %v881
        %v884 = vmax.f32 %v784, %v882
        %s885 = scalar_lea.vmem %s173, 256
        %v886 = vld [vmem:[%s885] sm:$0xff]
        %v887 = vld [vmem:[%s885 + $0x8] sm:$0xff]
        %v888 = vld [vmem:[%s885 + $0x10] sm:$0xff]
        %v889 = vld [vmem:[%s885 + $0x18] sm:$0xff]
        %v890 = vld [vmem:[%s885 + $0x20] sm:$0xff]
        %v891 = vld [vmem:[%s885 + $0x28] sm:$0xff]
        %v892 = vld [vmem:[%s885 + $0x30] sm:$0xff]
        %v893 = vld [vmem:[%s885 + $0x38] sm:$0xff]
        %v894 = vld [vmem:[%s885 + $0x40] sm:$0xff]
        %v895 = vld [vmem:[%s885 + $0x48] sm:$0xff]
        %v896 = vld [vmem:[%s885 + $0x50] sm:$0xff]
        %v897 = vld [vmem:[%s885 + $0x58] sm:$0xff]
        %v898 = vld [vmem:[%s885 + $0x60] sm:$0xff]
        %v899 = vld [vmem:[%s885 + $0x68] sm:$0xff]
        %v900 = vld [vmem:[%s885 + $0x70] sm:$0xff]
        %v901 = vld [vmem:[%s885 + $0x78] sm:$0xff]
        %902 = vmatprep.subr.mxu0 0.0
        %903 = vmatpush1.msra.mxu0 %v901
        %904 = vmatprep.subr.mxu0 0.0
        %905 = vmatpush1.msra.mxu0 %v900
        %906 = vmatprep.subr.mxu0 0.0
        %907 = vmatpush1.msra.mxu0 %v899
        %908 = vmatprep.subr.mxu0 0.0
        %909 = vmatpush1.msra.mxu0 %v898
        %910 = vmatprep.subr.mxu0 0.0
        %911 = vmatpush1.msra.mxu0 %v897
        %912 = vmatprep.subr.mxu0 0.0
        %913 = vmatpush1.msra.mxu0 %v896
        %914 = vmatprep.subr.mxu0 0.0
        %915 = vmatpush1.msra.mxu0 %v895
        %916 = vmatprep.subr.mxu0 0.0
        %917 = vmatpush1.msra.mxu0 %v894
        %918 = vmatprep.subr.mxu0 0.0
        %919 = vmatpush1.msra.mxu0 %v893
        %920 = vmatprep.subr.mxu0 0.0
        %921 = vmatpush1.msra.mxu0 %v892
        %922 = vmatprep.subr.mxu0 0.0
        %923 = vmatpush1.msra.mxu0 %v891
        %924 = vmatprep.subr.mxu0 0.0
        %925 = vmatpush1.msra.mxu0 %v890
        %926 = vmatprep.subr.mxu0 0.0
        %927 = vmatpush1.msra.mxu0 %v889
        %928 = vmatprep.subr.mxu0 0.0
        %929 = vmatpush1.msra.mxu0 %v888
        %930 = vmatprep.subr.mxu0 0.0
        %931 = vmatpush1.msra.mxu0 %v887
        %932 = vmatprep.subr.mxu0 0.0
        %933 = vmatpush1.msra.mxu0 %v886
        %934 = vmatprep.subr.mxu0 0.0
        %935 = vmatpush2.msra.mxu0 0.0
        %936 = vmatprep.subr.mxu0 0.0
        %937 = vmatpush2.msra.mxu0 0.0
        %938 = vmatprep.subr.mxu0 0.0
        %939 = vmatpush2.msra.mxu0 0.0
        %940 = vmatprep.subr.mxu0 0.0
        %941 = vmatpush2.msra.mxu0 0.0
        %942 = vmatprep.subr.mxu0 0.0
        %943 = vmatpush2.msra.mxu0 0.0
        %944 = vmatprep.subr.mxu0 0.0
        %945 = vmatpush2.msra.mxu0 0.0
        %946 = vmatprep.subr.mxu0 0.0
        %947 = vmatpush2.msra.mxu0 0.0
        %948 = vmatprep.subr.mxu0 0.0
        %949 = vmatpush2.msra.mxu0 0.0
        %950 = vmatprep.subr.mxu0 0.0
        %951 = vmatpush2.msra.mxu0 0.0
        %952 = vmatprep.subr.mxu0 0.0
        %953 = vmatpush2.msra.mxu0 0.0
        %954 = vmatprep.subr.mxu0 0.0
        %955 = vmatpush2.msra.mxu0 0.0
        %956 = vmatprep.subr.mxu0 0.0
        %957 = vmatpush2.msra.mxu0 0.0
        %958 = vmatprep.subr.mxu0 0.0
        %959 = vmatpush2.msra.mxu0 0.0
        %960 = vmatprep.subr.mxu0 0.0
        %961 = vmatpush2.msra.mxu0 0.0
        %962 = vmatprep.subr.mxu0 0.0
        %963 = vmatpush2.msra.mxu0 0.0
        %964 = vmatprep.subr.mxu0 0.0
        %965 = vmatpush2.msra.mxu0 0.0
        %966 = vmatprep.mubr.f32.mxu0 0.0
        %967 = vmatmul.mubr.f32.gmra.mxu0 %v178
        %v968 = vpop.f32.mrf.mxu0
        %v969 = vadd.f32 0.0, %v968
        %v970 = vpop.f32.mrf.mxu0
        %971 = vmatprep.mubr.f32.mxu0 0.0
        %972 = vmatmul.mubr.f32.gmra.mxu0 %v179
        %v973 = vpop.f32.mrf.mxu0
        %v974 = vadd.f32 0.0, %v973
        %v975 = vpop.f32.mrf.mxu0
        %976 = vdwg.mxu0
        %v977 = vmul.f32 %v969, %v762
        %v978 = vmul.f32 %v974, %v767
        %v979 = vadd.f32 %v977, %v774
        %v980 = vadd.f32 %v978, %v779
        %v981 = vmax.f32 %v979, 0.0
        %v982 = vmax.f32 %v980, 0.0
        %v983 = vmax.f32 %v883, %v981
        %v984 = vmax.f32 %v884, %v982
        %s985 = scalar_lea.vmem %s173, 384
        %v986 = vld [vmem:[%s985] sm:$0xff]
        %v987 = vld [vmem:[%s985 + $0x8] sm:$0xff]
        %v988 = vld [vmem:[%s985 + $0x10] sm:$0xff]
        %v989 = vld [vmem:[%s985 + $0x18] sm:$0xff]
        %v990 = vld [vmem:[%s985 + $0x20] sm:$0xff]
        %v991 = vld [vmem:[%s985 + $0x28] sm:$0xff]
        %v992 = vld [vmem:[%s985 + $0x30] sm:$0xff]
        %v993 = vld [vmem:[%s985 + $0x38] sm:$0xff]
        %v994 = vld [vmem:[%s985 + $0x40] sm:$0xff]
        %v995 = vld [vmem:[%s985 + $0x48] sm:$0xff]
        %v996 = vld [vmem:[%s985 + $0x50] sm:$0xff]
        %v997 = vld [vmem:[%s985 + $0x58] sm:$0xff]
        %v998 = vld [vmem:[%s985 + $0x60] sm:$0xff]
        %v999 = vld [vmem:[%s985 + $0x68] sm:$0xff]
        %v1000 = vld [vmem:[%s985 + $0x70] sm:$0xff]
        %v1001 = vld [vmem:[%s985 + $0x78] sm:$0xff]
        %1002 = vmatprep.subr.mxu0 0.0
        %1003 = vmatpush1.msra.mxu0 %v1001
        %1004 = vmatprep.subr.mxu0 0.0
        %1005 = vmatpush1.msra.mxu0 %v1000
        %1006 = vmatprep.subr.mxu0 0.0
        %1007 = vmatpush1.msra.mxu0 %v999
        %1008 = vmatprep.subr.mxu0 0.0
        %1009 = vmatpush1.msra.mxu0 %v998
        %1010 = vmatprep.subr.mxu0 0.0
        %1011 = vmatpush1.msra.mxu0 %v997
        %1012 = vmatprep.subr.mxu0 0.0
        %1013 = vmatpush1.msra.mxu0 %v996
        %1014 = vmatprep.subr.mxu0 0.0
        %1015 = vmatpush1.msra.mxu0 %v995
        %1016 = vmatprep.subr.mxu0 0.0
        %1017 = vmatpush1.msra.mxu0 %v994
        %1018 = vmatprep.subr.mxu0 0.0
        %1019 = vmatpush1.msra.mxu0 %v993
        %1020 = vmatprep.subr.mxu0 0.0
        %1021 = vmatpush1.msra.mxu0 %v992
        %1022 = vmatprep.subr.mxu0 0.0
        %1023 = vmatpush1.msra.mxu0 %v991
        %1024 = vmatprep.subr.mxu0 0.0
        %1025 = vmatpush1.msra.mxu0 %v990
        %1026 = vmatprep.subr.mxu0 0.0
        %1027 = vmatpush1.msra.mxu0 %v989
        %1028 = vmatprep.subr.mxu0 0.0
        %1029 = vmatpush1.msra.mxu0 %v988
        %1030 = vmatprep.subr.mxu0 0.0
        %1031 = vmatpush1.msra.mxu0 %v987
        %1032 = vmatprep.subr.mxu0 0.0
        %1033 = vmatpush1.msra.mxu0 %v986
        %1034 = vmatprep.subr.mxu0 0.0
        %1035 = vmatpush2.msra.mxu0 0.0
        %1036 = vmatprep.subr.mxu0 0.0
        %1037 = vmatpush2.msra.mxu0 0.0
        %1038 = vmatprep.subr.mxu0 0.0
        %1039 = vmatpush2.msra.mxu0 0.0
        %1040 = vmatprep.subr.mxu0 0.0
        %1041 = vmatpush2.msra.mxu0 0.0
        %1042 = vmatprep.subr.mxu0 0.0
        %1043 = vmatpush2.msra.mxu0 0.0
        %1044 = vmatprep.subr.mxu0 0.0
        %1045 = vmatpush2.msra.mxu0 0.0
        %1046 = vmatprep.subr.mxu0 0.0
        %1047 = vmatpush2.msra.mxu0 0.0
        %1048 = vmatprep.subr.mxu0 0.0
        %1049 = vmatpush2.msra.mxu0 0.0
        %1050 = vmatprep.subr.mxu0 0.0
        %1051 = vmatpush2.msra.mxu0 0.0
        %1052 = vmatprep.subr.mxu0 0.0
        %1053 = vmatpush2.msra.mxu0 0.0
        %1054 = vmatprep.subr.mxu0 0.0
        %1055 = vmatpush2.msra.mxu0 0.0
        %1056 = vmatprep.subr.mxu0 0.0
        %1057 = vmatpush2.msra.mxu0 0.0
        %1058 = vmatprep.subr.mxu0 0.0
        %1059 = vmatpush2.msra.mxu0 0.0
        %1060 = vmatprep.subr.mxu0 0.0
        %1061 = vmatpush2.msra.mxu0 0.0
        %1062 = vmatprep.subr.mxu0 0.0
        %1063 = vmatpush2.msra.mxu0 0.0
        %1064 = vmatprep.subr.mxu0 0.0
        %1065 = vmatpush2.msra.mxu0 0.0
        %1066 = vmatprep.mubr.f32.mxu0 0.0
        %1067 = vmatmul.mubr.f32.gmra.mxu0 %v178
        %v1068 = vpop.f32.mrf.mxu0
        %v1069 = vadd.f32 0.0, %v1068
        %v1070 = vpop.f32.mrf.mxu0
        %1071 = vmatprep.mubr.f32.mxu0 0.0
        %1072 = vmatmul.mubr.f32.gmra.mxu0 %v179
        %v1073 = vpop.f32.mrf.mxu0
        %v1074 = vadd.f32 0.0, %v1073
        %v1075 = vpop.f32.mrf.mxu0
        %1076 = vdwg.mxu0
        %v1077 = vmul.f32 %v1069, %v762
        %v1078 = vmul.f32 %v1074, %v767
        %v1079 = vadd.f32 %v1077, %v774
        %v1080 = vadd.f32 %v1078, %v779
        %v1081 = vmax.f32 %v1079, 0.0
        %v1082 = vmax.f32 %v1080, 0.0
        %v1083 = vmax.f32 %v983, %v1081
        %v1084 = vmax.f32 %v984, %v1082
        %1085 = vst [vmem:[%s177] sm:$0xff] %v1083
        %1086 = vst [vmem:[%s177 + $0x8] sm:$0xff] %v1084
      $region44: #{basic_ext_forward.1} parent=31 // pred_fallthru
        _
      %p1087 = scmp.lt.s32.totalorder %s19, 0
      %s1088 = scalar_select %p1087, %s19, 0
      %s1089 = smul.addr %s1088, 8
      %s1090 = scalar_lea.vmem %s3, %s1089
      // Predicated region
      $region45: #{basic_ext_forward.1} parent=31 // pred_check
        %p1091 = pneg %p112
      $region46: #{basic_ext_forward.1} parent=31 // pred_check_branch
        %1093 = sbr.rel (%p1091) target = $region48
      $region47: #{basic_ext_forward.1} parent=31 // pred_region
        _
      $region48: #{basic_ext_forward.1} parent=31 // pred_fallthru
        _
      // Predicated region
      $region49: #{basic_ext_forward.1} parent=31 // pred_check
        %p1094 = pneg %p112
      $region50: #{basic_ext_forward.1} parent=31 // pred_check_branch
        %1096 = sbr.rel (%p1094) target = $region52
      $region51: #{basic_ext_forward.1} parent=31 // pred_region
        %p1097 = scmp.lt.s32.totalorder %s19, 0
        %s1098 = scalar_select %p1097, %s19, 0
        %s1099 = smul.addr %s1098, 8
        %s1100 = scalar_lea.vmem %s3, %s1099
      $region52: #{basic_ext_forward.1} parent=31 // pred_fallthru
        _
    $region32: #{basic_ext_forward.1} parent=5 // pred_fallthru
      _
    %p1101 = scmp.le.s32.totalorder 2, %s9
    // Predicated region
    $region53: #{basic_ext_forward.1} parent=5 // pred_check
      %p1102 = pneg %p1101
    $region54: #{basic_ext_forward.1} parent=5 // pred_check_branch
      %1104 = sbr.rel (%p1102) target = $region56
    $region55: #{basic_ext_forward.1} parent=5 // pred_region
      %s1105 = ssub.s32 %s9, 2
    $region56: #{basic_ext_forward.1} parent=5 // pred_fallthru
      _
  $region6: #{basic_ext_forward.1} parent=0 // loop_footer
    %s13 = sadd.s32 1, %s9
  $region7: #{basic_ext_forward.1} parent=0 // loop_footer_branch
    %8 = sbr.rel target = $region3
  $region8: #{basic_ext_forward.1} parent=0 // loop_exit
    _

</llo_original>
